<compile_context>
chip_gen: v7x
topology: tpu7x:2x2x1
jax: 0.10.0
libtpu: 0.0.40
codegen_flags: <defaults>
</compile_context>

<pallas_src>
import functools
import math

import jax
import jax.numpy as jnp
from jax.experimental import pallas as pl
from jax.experimental.pallas import tpu as pltpu


def _round_up(x: int, m: int) -> int:
    return (x + m - 1) // m * m


# ----------------------------------------------------------------------------
# Fused whole-decoder kernel: chained MXU matmuls, activations on the VPU/EUP,
# every intermediate activation stays in VMEM/vregs.
# ----------------------------------------------------------------------------
def _fused_decoder_kernel(*refs, activations):
    """refs = (z_ref, w0, b0, w1, b1, ..., wL, bL, o_ref)."""
    z_ref = refs[0]
    o_ref = refs[-1]

    h = z_ref[...].astype(jnp.float32)
    for i, act in enumerate(activations):
        w_ref = refs[1 + 2 * i]
        b_ref = refs[2 + 2 * i]
        h = jnp.dot(h, w_ref[...], preferred_element_type=jnp.float32)
        h = h + b_ref[...]                      # (tm, Np) + (1, Np) broadcast
        if act == "leaky_relu":
            h = jnp.maximum(h, 0.01 * h)        # PyTorch default slope
        elif act == "sigmoid":
            h = jax.nn.sigmoid(h)               # EUP transcendental
        # act == "none": fall through
    o_ref[...] = h.astype(o_ref.dtype)


# ----------------------------------------------------------------------------
# Decoder parameter construction (mirrors VanillaVAEDecoder.__init__).
# Weights are pre-padded ONCE here to lane-aligned f32 buffers for the kernel.
# ----------------------------------------------------------------------------
def init_decoder_params(key, latent_dim, out_features_dim, hidden_dims):
    hd = list(hidden_dims)
    rhd = hd[::-1]  # hidden_dims.reverse()

    layer_dims = []
    # decoder_input: Linear(latent_dim, hidden_dims[-1]) — no activation.
    layer_dims.append((latent_dim, rhd[0], "none"))
    # decoder blocks: Linear -> Dropout(identity in eval) -> LeakyReLU.
    for i in range(len(rhd) - 1):
        layer_dims.append((rhd[i], rhd[i + 1], "leaky_relu"))
    # final_layer: Linear -> LeakyReLU -> Linear -> Sigmoid.
    layer_dims.append((rhd[-1], rhd[-1], "leaky_relu"))
    layer_dims.append((rhd[-1], out_features_dim, "sigmoid"))

    raw, padded = [], []
    for fan_in, fan_out, act in layer_dims:
        key, kw, kb = jax.random.split(key, 3)
        bound = 1.0 / math.sqrt(fan_in)  # PyTorch Linear default init range
        w = jax.random.uniform(kw, (fan_in, fan_out), jnp.float32, -bound, bound)
        b = jax.random.uniform(kb, (fan_out,), jnp.float32, -bound, bound)
        raw.append((w, b, act))

        kp = _round_up(fan_in, 128)
        np_ = _round_up(fan_out, 128)
        wp = jnp.pad(w, ((0, kp - fan_in), (0, np_ - fan_out)))
        bp = jnp.pad(b, (0, np_ - fan_out)).reshape(1, np_)
        padded.append((wp, bp, act))

    return {
        "raw": raw,          # unpadded (for the pure-JAX reference)
        "padded": padded,    # kernel-ready, lane-aligned
        "latent_dim": latent_dim,
        "out_dim": out_features_dim,
    }


# ----------------------------------------------------------------------------
# Forward: one pallas_call for the whole decoder.
# ----------------------------------------------------------------------------
def vanilla_vae_decoder_forward(z, params, *, tm=256):
    padded = params["padded"]
    out_dim = params["out_dim"]
    M, K = z.shape
    assert K == params["latent_dim"]

    Kp0 = padded[0][0].shape[0]       # padded latent dim
    Np_last = padded[-1][0].shape[1]  # padded output dim

    Mp = _round_up(M, 8)
    tm_ = min(tm, Mp)
    Mp = _round_up(Mp, tm_)

    zp = z
    if (Mp, Kp0) != (M, K):
        zp = jnp.pad(z, ((0, Mp - M), (0, Kp0 - K)))   # single per-forward pad

    grid = (Mp // tm_,)
    activations = tuple(act for _, _, act in padded)

    in_specs = [pl.BlockSpec((tm_, Kp0), lambda i: (i, 0))]
    operands = [zp]
    for wp, bp, _ in padded:
        kp, np_ = wp.shape
        # Constant index_map -> weights stay VMEM-resident across grid steps.
        in_specs.append(pl.BlockSpec((kp, np_), lambda i: (0, 0)))
        in_specs.append(pl.BlockSpec((1, np_), lambda i: (0, 0)))
        operands += [wp, bp]

    # VMEM budget: double-buffered tiles + all resident weights, capped for
    # v7x's 64 MiB physical VMEM.
    w_bytes = sum(wp.size * 4 + bp.size * 4 for wp, bp, _ in padded)
    tile_bytes = (tm_ * Kp0 + tm_ * Np_last) * 4
    vmem_limit = min(2 * (w_bytes + tile_bytes) + (8 << 20), 32 << 20)

    out = pl.pallas_call(
        functools.partial(_fused_decoder_kernel, activations=activations),
        out_shape=jax.ShapeDtypeStruct((Mp, Np_last), z.dtype),
        grid_spec=pltpu.PrefetchScalarGridSpec(
            num_scalar_prefetch=0,
            grid=grid,
            in_specs=in_specs,
            out_specs=pl.BlockSpec((tm_, Np_last), lambda i: (i, 0)),
        ),
        compiler_params=pltpu.CompilerParams(
            # Single tile -> no pointless megacore split; multi-tile batch ->
            # shard across TensorCores (v7x).
            dimension_semantics=("parallel",) if grid[0] > 1 else ("arbitrary",),
            vmem_limit_bytes=vmem_limit,
        ),
    )(*operands)

    if (Mp, Np_last) != (M, out_dim):
        out = out[:M, :out_dim]       # single per-forward slice (no-op if aligned)
    return out


def reference_forward(z, params):
    """Pure-JAX reference of the same forward (for correctness check)."""
    h = z
    for w, b, act in params["raw"]:
        h = h @ w + b
        if act == "leaky_relu":
            h = jnp.where(h > 0, h, 0.01 * h)
        elif act == "sigmoid":
            h = jax.nn.sigmoid(h)
    return h


if __name__ == "__main__":
    key = jax.random.PRNGKey(0)
    key_p, key_z = jax.random.split(key)

    # Small, module-consistent shapes.
    latent_dim = 16
    hidden_dims = [32, 64]
    out_features_dim = 256
    batch = 8

    params = init_decoder_params(key_p, latent_dim, out_features_dim, hidden_dims)
    z = jax.random.normal(key_z, (batch, latent_dim), dtype=jnp.float32)

    fwd = jax.jit(lambda zz: vanilla_vae_decoder_forward(zz, params))
    y = fwd(z)
    jax.block_until_ready(y)

    y_ref = reference_forward(z, params)
    assert y.shape == (batch, out_features_dim) and y.dtype == z.dtype
    assert jnp.allclose(y, y_ref, rtol=1e-5, atol=1e-5), (
        float(jnp.max(jnp.abs(y - y_ref)))
    )

    print("KERNEL_OK")
</pallas_src>

<mosaic_0001>
module attributes {stable_mosaic.version = 11 : i64} {
  func.func @_fused_decoder_kernel(%arg0: i32, %arg1: memref<8x128xf32, #tpu.memory_space<vmem>>, %arg2: memref<128x128xf32, #tpu.memory_space<vmem>>, %arg3: memref<1x128xf32, #tpu.memory_space<vmem>>, %arg4: memref<128x128xf32, #tpu.memory_space<vmem>>, %arg5: memref<1x128xf32, #tpu.memory_space<vmem>>, %arg6: memref<128x128xf32, #tpu.memory_space<vmem>>, %arg7: memref<1x128xf32, #tpu.memory_space<vmem>>, %arg8: memref<128x256xf32, #tpu.memory_space<vmem>>, %arg9: memref<1x256xf32, #tpu.memory_space<vmem>>, %arg10: memref<8x256xf32, #tpu.memory_space<vmem>>) attributes {dimension_semantics = [#tpu.dimension_semantics<arbitrary>], iteration_bounds = array<i64: 1>, scalar_prefetch = 0 : i64, scratch_operands = 0 : i64, tpu.core_type = #tpu.core_type<tc>, window_params = [{transform_indices = @transform_0, window_bounds = array<i64: 8, 128>}, {pipeline_mode = #tpu.pipeline_mode<synchronous>, transform_indices = @transform_1, window_bounds = array<i64: 128, 128>}, {pipeline_mode = #tpu.pipeline_mode<synchronous>, transform_indices = @transform_2, window_bounds = array<i64: 1, 128>}, {pipeline_mode = #tpu.pipeline_mode<synchronous>, transform_indices = @transform_3, window_bounds = array<i64: 128, 128>}, {pipeline_mode = #tpu.pipeline_mode<synchronous>, transform_indices = @transform_4, window_bounds = array<i64: 1, 128>}, {pipeline_mode = #tpu.pipeline_mode<synchronous>, transform_indices = @transform_5, window_bounds = array<i64: 128, 128>}, {pipeline_mode = #tpu.pipeline_mode<synchronous>, transform_indices = @transform_6, window_bounds = array<i64: 1, 128>}, {pipeline_mode = #tpu.pipeline_mode<synchronous>, transform_indices = @transform_7, window_bounds = array<i64: 128, 256>}, {pipeline_mode = #tpu.pipeline_mode<synchronous>, transform_indices = @transform_8, window_bounds = array<i64: 1, 256>}, {transform_indices = @transform_9, window_bounds = array<i64: 8, 256>}]} {
    %c0 = arith.constant 0 : index
    %c0_0 = arith.constant 0 : index
    %0 = vector.load %arg1[%c0, %c0_0] : memref<8x128xf32, #tpu.memory_space<vmem>>, vector<8x128xf32>
    %c0_1 = arith.constant 0 : index
    %c0_2 = arith.constant 0 : index
    %1 = vector.load %arg2[%c0_1, %c0_2] : memref<128x128xf32, #tpu.memory_space<vmem>>, vector<128x128xf32>
    %cst = arith.constant dense<0.000000e+00> : vector<8x128xf32>
    %2 = tpu.matmul %0, %1, %cst {dimension_numbers = #tpu.dot_dimension_numbers<[1], [0], [0], [1], [0, 0, 1, 1], [], []>} : vector<8x128xf32>, vector<128x128xf32>, vector<8x128xf32> -> vector<8x128xf32>
    %c0_3 = arith.constant 0 : index
    %c0_4 = arith.constant 0 : index
    %3 = vector.load %arg3[%c0_3, %c0_4] : memref<1x128xf32, #tpu.memory_space<vmem>>, vector<1x128xf32>
    %4 = vector.broadcast %3 : vector<1x128xf32> to vector<8x128xf32>
    %5 = arith.addf %2, %4 : vector<8x128xf32>
    %c0_5 = arith.constant 0 : index
    %c0_6 = arith.constant 0 : index
    %6 = vector.load %arg4[%c0_5, %c0_6] : memref<128x128xf32, #tpu.memory_space<vmem>>, vector<128x128xf32>
    %cst_7 = arith.constant dense<0.000000e+00> : vector<8x128xf32>
    %7 = tpu.matmul %5, %6, %cst_7 {dimension_numbers = #tpu.dot_dimension_numbers<[1], [0], [0], [1], [0, 0, 1, 1], [], []>} : vector<8x128xf32>, vector<128x128xf32>, vector<8x128xf32> -> vector<8x128xf32>
    %c0_8 = arith.constant 0 : index
    %c0_9 = arith.constant 0 : index
    %8 = vector.load %arg5[%c0_8, %c0_9] : memref<1x128xf32, #tpu.memory_space<vmem>>, vector<1x128xf32>
    %9 = vector.broadcast %8 : vector<1x128xf32> to vector<8x128xf32>
    %10 = arith.addf %7, %9 : vector<8x128xf32>
    %cst_10 = arith.constant 0.00999999977 : f32
    %11 = vector.broadcast %cst_10 : f32 to vector<8x128xf32>
    %12 = arith.mulf %11, %10 : vector<8x128xf32>
    %13 = arith.maximumf %10, %12 : vector<8x128xf32>
    %c0_11 = arith.constant 0 : index
    %c0_12 = arith.constant 0 : index
    %14 = vector.load %arg6[%c0_11, %c0_12] : memref<128x128xf32, #tpu.memory_space<vmem>>, vector<128x128xf32>
    %cst_13 = arith.constant dense<0.000000e+00> : vector<8x128xf32>
    %15 = tpu.matmul %13, %14, %cst_13 {dimension_numbers = #tpu.dot_dimension_numbers<[1], [0], [0], [1], [0, 0, 1, 1], [], []>} : vector<8x128xf32>, vector<128x128xf32>, vector<8x128xf32> -> vector<8x128xf32>
    %c0_14 = arith.constant 0 : index
    %c0_15 = arith.constant 0 : index
    %16 = vector.load %arg7[%c0_14, %c0_15] : memref<1x128xf32, #tpu.memory_space<vmem>>, vector<1x128xf32>
    %17 = vector.broadcast %16 : vector<1x128xf32> to vector<8x128xf32>
    %18 = arith.addf %15, %17 : vector<8x128xf32>
    %cst_16 = arith.constant 0.00999999977 : f32
    %19 = vector.broadcast %cst_16 : f32 to vector<8x128xf32>
    %20 = arith.mulf %19, %18 : vector<8x128xf32>
    %21 = arith.maximumf %18, %20 : vector<8x128xf32>
    %c0_17 = arith.constant 0 : index
    %c0_18 = arith.constant 0 : index
    %22 = vector.load %arg8[%c0_17, %c0_18] : memref<128x256xf32, #tpu.memory_space<vmem>>, vector<128x256xf32>
    %cst_19 = arith.constant dense<0.000000e+00> : vector<8x256xf32>
    %23 = tpu.matmul %21, %22, %cst_19 {dimension_numbers = #tpu.dot_dimension_numbers<[1], [0], [0], [1], [0, 0, 1, 1], [], []>} : vector<8x128xf32>, vector<128x256xf32>, vector<8x256xf32> -> vector<8x256xf32>
    %c0_20 = arith.constant 0 : index
    %c0_21 = arith.constant 0 : index
    %24 = vector.load %arg9[%c0_20, %c0_21] : memref<1x256xf32, #tpu.memory_space<vmem>>, vector<1x256xf32>
    %25 = vector.broadcast %24 : vector<1x256xf32> to vector<8x256xf32>
    %26 = arith.addf %23, %25 : vector<8x256xf32>
    %27 = arith.negf %26 : vector<8x256xf32>
    %28 = math.exp %27 : vector<8x256xf32>
    %cst_22 = arith.constant 1.000000e+00 : f32
    %29 = vector.broadcast %cst_22 : f32 to vector<8x256xf32>
    %30 = arith.addf %29, %28 : vector<8x256xf32>
    %31 = arith.divf %29, %30 : vector<8x256xf32>
    %c0_23 = arith.constant 0 : index
    %c0_24 = arith.constant 0 : index
    %32 = vector.load %arg10[%c0_23, %c0_24] : memref<8x256xf32, #tpu.memory_space<vmem>>, vector<8x256xf32>
    tpu.vector_store %arg10[%c0_23, %c0_24], %31 {strides = array<i32>} : memref<8x256xf32, #tpu.memory_space<vmem>>, vector<8x256xf32>,
    return
  }
  func.func @transform_0(%arg0: i32) -> (i32, i32) {
    %c0_i32 = arith.constant 0 : i32
    %c0_i32_0 = arith.constant 0 : i32
    return %arg0, %c0_i32 : i32, i32
  }
  func.func @transform_1(%arg0: i32) -> (i32, i32) {
    %c0_i32 = arith.constant 0 : i32
    %c0_i32_0 = arith.constant 0 : i32
    %c0_i32_1 = arith.constant 0 : i32
    return %c0_i32, %c0_i32_0 : i32, i32
  }
  func.func @transform_2(%arg0: i32) -> (i32, i32) {
    %c0_i32 = arith.constant 0 : i32
    %c0_i32_0 = arith.constant 0 : i32
    %c0_i32_1 = arith.constant 0 : i32
    return %c0_i32, %c0_i32_0 : i32, i32
  }
  func.func @transform_3(%arg0: i32) -> (i32, i32) {
    %c0_i32 = arith.constant 0 : i32
    %c0_i32_0 = arith.constant 0 : i32
    %c0_i32_1 = arith.constant 0 : i32
    return %c0_i32, %c0_i32_0 : i32, i32
  }
  func.func @transform_4(%arg0: i32) -> (i32, i32) {
    %c0_i32 = arith.constant 0 : i32
    %c0_i32_0 = arith.constant 0 : i32
    %c0_i32_1 = arith.constant 0 : i32
    return %c0_i32, %c0_i32_0 : i32, i32
  }
  func.func @transform_5(%arg0: i32) -> (i32, i32) {
    %c0_i32 = arith.constant 0 : i32
    %c0_i32_0 = arith.constant 0 : i32
    %c0_i32_1 = arith.constant 0 : i32
    return %c0_i32, %c0_i32_0 : i32, i32
  }
  func.func @transform_6(%arg0: i32) -> (i32, i32) {
    %c0_i32 = arith.constant 0 : i32
    %c0_i32_0 = arith.constant 0 : i32
    %c0_i32_1 = arith.constant 0 : i32
    return %c0_i32, %c0_i32_0 : i32, i32
  }
  func.func @transform_7(%arg0: i32) -> (i32, i32) {
    %c0_i32 = arith.constant 0 : i32
    %c0_i32_0 = arith.constant 0 : i32
    %c0_i32_1 = arith.constant 0 : i32
    return %c0_i32, %c0_i32_0 : i32, i32
  }
  func.func @transform_8(%arg0: i32) -> (i32, i32) {
    %c0_i32 = arith.constant 0 : i32
    %c0_i32_0 = arith.constant 0 : i32
    %c0_i32_1 = arith.constant 0 : i32
    return %c0_i32, %c0_i32_0 : i32, i32
  }
  func.func @transform_9(%arg0: i32) -> (i32, i32) {
    %c0_i32 = arith.constant 0 : i32
    %c0_i32_0 = arith.constant 0 : i32
    return %arg0, %c0_i32 : i32, i32
  }
}

</mosaic_0001>

<llo_original>
// kernel: _lambda_.1
$region0: #{_lambda_.1}
  #allocation0 [shape = 'u32[]', space=smem, size = 0x4, offset = 0x4, fixed_abs, tag = 'smem constant byte address 0x4 - core index']
  #allocation1 [shape = 'u32[144,128]{1,0:T(1,128)}', space=vmem, size = 0x12000, scoped, tag = 'internal scratch']
  %s0 = inlined_call_operand.vmem [shape: f32[8,128], index: 0, kind: input, shape index: {}]
  %s1 = inlined_call_operand.hbm [shape: f32[128,128], index: 1, kind: input, shape index: {}]
  %s2 = inlined_call_operand.vmem [shape: f32[1,128], index: 2, kind: input, shape index: {}]
  %s3 = inlined_call_operand.hbm [shape: f32[128,128], index: 3, kind: input, shape index: {}]
  %s4 = inlined_call_operand.vmem [shape: f32[1,128], index: 4, kind: input, shape index: {}]
  %s5 = inlined_call_operand.hbm [shape: f32[128,128], index: 5, kind: input, shape index: {}]
  %s6 = inlined_call_operand.vmem [shape: f32[1,128], index: 6, kind: input, shape index: {}]
  %s7 = inlined_call_operand.hbm [shape: f32[128,256], index: 7, kind: input, shape index: {}]
  %s8 = inlined_call_operand.vmem [shape: f32[1,256], index: 8, kind: input, shape index: {}]
  %s9 = inlined_call_operand.hbm [shape: f32[8,256], index: 9, kind: output, shape index: {}]
  %s10 = sld [smem:[#allocation0]]
  $region62: #{_lambda_.1} parent=0
    _
  %s12 = ssub.s32 1, %s10
  %s13 = scalar_select 0, %s12, %s10
  $region1: #{_lambda_.1} parent=0
    #allocation2 [shape = 'u8[65536]{0}', space=vmem, size = 0x10000, scoped, tag = 'input window, operand 1, single buffered']
    #allocation3 [shape = 's32[1]{0}', space=sflag, size = 0x4, scoped, tag = 'scoped memory for _lambda_.1']
    #allocation4 [shape = 's32[1]{0}', space=sflag, size = 0x4, scoped, tag = 'scoped memory for _lambda_.1']
    #allocation5 [shape = 'u8[65536]{0}', space=vmem, size = 0x10000, scoped, tag = 'input window, operand 3, single buffered']
    #allocation6 [shape = 's32[1]{0}', space=sflag, size = 0x4, scoped, tag = 'scoped memory for _lambda_.1']
    #allocation7 [shape = 'u8[65536]{0}', space=vmem, size = 0x10000, scoped, tag = 'input window, operand 5, single buffered']
    #allocation8 [shape = 'u8[131072]{0}', space=vmem, size = 0x20000, scoped, tag = 'input window, operand 7, single buffered']
    #allocation9 [shape = 's32[1]{0}', space=sflag, size = 0x4, scoped, tag = 'scoped memory for _lambda_.1']
    #allocation10 [shape = 'u8[8192]{0}', space=vmem, size = 0x2000, scoped, tag = 'output window, operand 0, single buffered']
    %14 = vsyncpa [#allocation3], 0
    %15 = vsyncpa [#allocation6], 0
    %16 = vsyncpa [#allocation9], 0
    %17 = vsyncpa [#allocation4], 0
    // Predicated region
    $region2: #{_lambda_.1} parent=1 // pred_check
      _
    $region3: #{_lambda_.1} parent=1 // pred_check_branch
      %19 = sbr.rel (0) target = $region5
    $region4: #{_lambda_.1} parent=1 // pred_region
      _
    $region5: #{_lambda_.1} parent=1 // pred_fallthru
      _
    // Predicated region
    $region6: #{_lambda_.1} parent=1 // pred_check
      _
    $region7: #{_lambda_.1} parent=1 // pred_check_branch
      %21 = sbr.rel (0) target = $region9
    $region8: #{_lambda_.1} parent=1 // pred_region
      %s23 = ssub.s32 2048, 2048
      %24 = vsyncadd [#allocation3], %s23
      %s25 = sshll.u32 [#allocation2], 4
      %s26 = int_to_ptr.vmem [resolvable:$true] %s25
      %31 = dma.hbm_to_vmem [thread:$0]  %s1, 2048, %s26, [#allocation3], 128, 128, 8
    $region9: #{_lambda_.1} parent=1 // pred_fallthru
      _
    // Predicated region
    $region10: #{_lambda_.1} parent=1 // pred_check
      _
    $region11: #{_lambda_.1} parent=1 // pred_check_branch
      %33 = sbr.rel (0) target = $region13
    $region12: #{_lambda_.1} parent=1 // pred_region
      _
    $region13: #{_lambda_.1} parent=1 // pred_fallthru
      _
    // Predicated region
    $region14: #{_lambda_.1} parent=1 // pred_check
      _
    $region15: #{_lambda_.1} parent=1 // pred_check_branch
      %35 = sbr.rel (0) target = $region17
    $region16: #{_lambda_.1} parent=1 // pred_region
      %s37 = ssub.s32 2048, 2048
      %38 = vsyncadd [#allocation6], %s37
      %s39 = sshll.u32 [#allocation5], 4
      %s40 = int_to_ptr.vmem [resolvable:$true] %s39
      %45 = dma.hbm_to_vmem [thread:$0]  %s3, 2048, %s40, [#allocation6], 128, 128, 8
    $region17: #{_lambda_.1} parent=1 // pred_fallthru
      _
    // Predicated region
    $region18: #{_lambda_.1} parent=1 // pred_check
      _
    $region19: #{_lambda_.1} parent=1 // pred_check_branch
      %47 = sbr.rel (0) target = $region21
    $region20: #{_lambda_.1} parent=1 // pred_region
      _
    $region21: #{_lambda_.1} parent=1 // pred_fallthru
      _
    // Predicated region
    $region22: #{_lambda_.1} parent=1 // pred_check
      _
    $region23: #{_lambda_.1} parent=1 // pred_check_branch
      %49 = sbr.rel (0) target = $region25
    $region24: #{_lambda_.1} parent=1 // pred_region
      %s51 = ssub.s32 2048, 2048
      %52 = vsyncadd [#allocation6], %s51
      %s53 = sshll.u32 [#allocation7], 4
      %s54 = int_to_ptr.vmem [resolvable:$true] %s53
      %59 = dma.hbm_to_vmem [thread:$0]  %s5, 2048, %s54, [#allocation6], 128, 128, 8
    $region25: #{_lambda_.1} parent=1 // pred_fallthru
      _
    // Predicated region
    $region26: #{_lambda_.1} parent=1 // pred_check
      _
    $region27: #{_lambda_.1} parent=1 // pred_check_branch
      %61 = sbr.rel (0) target = $region29
    $region28: #{_lambda_.1} parent=1 // pred_region
      _
    $region29: #{_lambda_.1} parent=1 // pred_fallthru
      _
    // Predicated region
    $region30: #{_lambda_.1} parent=1 // pred_check
      _
    $region31: #{_lambda_.1} parent=1 // pred_check_branch
      %63 = sbr.rel (0) target = $region33
    $region32: #{_lambda_.1} parent=1 // pred_region
      %s65 = ssub.s32 4096, 4096
      %66 = vsyncadd [#allocation9], %s65
      %s67 = sshll.u32 [#allocation8], 4
      %s68 = int_to_ptr.vmem [resolvable:$true] %s67
      %73 = dma.hbm_to_vmem [thread:$0]  %s7, 4096, %s68, [#allocation9], 256, 256, 16
    $region33: #{_lambda_.1} parent=1 // pred_fallthru
      _
    // Predicated region
    $region34: #{_lambda_.1} parent=1 // pred_check
      _
    $region35: #{_lambda_.1} parent=1 // pred_check_branch
      %75 = sbr.rel (0) target = $region37
    $region36: #{_lambda_.1} parent=1 // pred_region
      _
    $region37: #{_lambda_.1} parent=1 // pred_fallthru
      _
    // Predicated region
    $region38: #{_lambda_.1} parent=1 // pred_check
      _
    $region39: #{_lambda_.1} parent=1 // pred_check_branch
      %77 = sbr.rel (0) target = $region41
    $region40: #{_lambda_.1} parent=1 // pred_region
      %78 = dma.done [#allocation3], 2048
    $region41: #{_lambda_.1} parent=1 // pred_fallthru
      _
    // Predicated region
    $region42: #{_lambda_.1} parent=1 // pred_check
      _
    $region43: #{_lambda_.1} parent=1 // pred_check_branch
      %80 = sbr.rel (0) target = $region45
    $region44: #{_lambda_.1} parent=1 // pred_region
      %81 = dma.done [#allocation6], 2048
    $region45: #{_lambda_.1} parent=1 // pred_fallthru
      _
    // Predicated region
    $region46: #{_lambda_.1} parent=1 // pred_check
      _
    $region47: #{_lambda_.1} parent=1 // pred_check_branch
      %83 = sbr.rel (0) target = $region49
    $region48: #{_lambda_.1} parent=1 // pred_region
      %84 = dma.done [#allocation6], 2048
    $region49: #{_lambda_.1} parent=1 // pred_fallthru
      _
    // Predicated region
    $region50: #{_lambda_.1} parent=1 // pred_check
      _
    $region51: #{_lambda_.1} parent=1 // pred_check_branch
      %86 = sbr.rel (0) target = $region53
    $region52: #{_lambda_.1} parent=1 // pred_region
      %87 = dma.done [#allocation9], 4096
    $region53: #{_lambda_.1} parent=1 // pred_fallthru
      _
    %v88 = vld [vmem:[%s0] sm:$0xff]
    %v89 = vld [vmem:[#allocation2] sm:$0xff]
    %v90 = vld [vmem:[#allocation2 + $0x8] sm:$0xff]
    %v91 = vld [vmem:[#allocation2 + $0x10] sm:$0xff]
    %v92 = vld [vmem:[#allocation2 + $0x18] sm:$0xff]
    %v93 = vld [vmem:[#allocation2 + $0x20] sm:$0xff]
    %v94 = vld [vmem:[#allocation2 + $0x28] sm:$0xff]
    %v95 = vld [vmem:[#allocation2 + $0x30] sm:$0xff]
    %v96 = vld [vmem:[#allocation2 + $0x38] sm:$0xff]
    %v97 = vld [vmem:[#allocation2 + $0x40] sm:$0xff]
    %v98 = vld [vmem:[#allocation2 + $0x48] sm:$0xff]
    %v99 = vld [vmem:[#allocation2 + $0x50] sm:$0xff]
    %v100 = vld [vmem:[#allocation2 + $0x58] sm:$0xff]
    %v101 = vld [vmem:[#allocation2 + $0x60] sm:$0xff]
    %v102 = vld [vmem:[#allocation2 + $0x68] sm:$0xff]
    %v103 = vld [vmem:[#allocation2 + $0x70] sm:$0xff]
    %v104 = vld [vmem:[#allocation2 + $0x78] sm:$0xff]
    %v105 = vld [vmem:[%s2] sm:$0x1]
    %v107 = vlaneseq
    %v108 = vshrl.u32 %v107, 7
    %v109 = vsub.s32 0, %v108
    %v110 = vrot.slane %v105, %v109
    %112 = vmatprep.subr.mxu0 0.0
    %113 = vmatpush1.msra.mxu0 %v89
    %114 = vmatprep.subr.mxu0 0.0
    %115 = vmatpush1.msra.mxu0 %v90
    %116 = vmatprep.subr.mxu0 0.0
    %117 = vmatpush1.msra.mxu0 %v91
    %118 = vmatprep.subr.mxu0 0.0
    %119 = vmatpush1.msra.mxu0 %v92
    %120 = vmatprep.subr.mxu0 0.0
    %121 = vmatpush1.msra.mxu0 %v93
    %122 = vmatprep.subr.mxu0 0.0
    %123 = vmatpush1.msra.mxu0 %v94
    %124 = vmatprep.subr.mxu0 0.0
    %125 = vmatpush1.msra.mxu0 %v95
    %126 = vmatprep.subr.mxu0 0.0
    %127 = vmatpush1.msra.mxu0 %v96
    %128 = vmatprep.subr.mxu0 0.0
    %129 = vmatpush1.msra.mxu0 %v97
    %130 = vmatprep.subr.mxu0 0.0
    %131 = vmatpush1.msra.mxu0 %v98
    %132 = vmatprep.subr.mxu0 0.0
    %133 = vmatpush1.msra.mxu0 %v99
    %134 = vmatprep.subr.mxu0 0.0
    %135 = vmatpush1.msra.mxu0 %v100
    %136 = vmatprep.subr.mxu0 0.0
    %137 = vmatpush1.msra.mxu0 %v101
    %138 = vmatprep.subr.mxu0 0.0
    %139 = vmatpush1.msra.mxu0 %v102
    %140 = vmatprep.subr.mxu0 0.0
    %141 = vmatpush1.msra.mxu0 %v103
    %142 = vmatprep.subr.mxu0 0.0
    %143 = vmatpush1.msra.mxu0 %v104
    %144 = vmatprep.subr.mxu0 0.0
    %145 = vmatpush1.msra.mxu0 0.0
    %146 = vmatprep.subr.mxu0 0.0
    %147 = vmatpush1.msra.mxu0 0.0
    %148 = vmatprep.subr.mxu0 0.0
    %149 = vmatpush1.msra.mxu0 0.0
    %150 = vmatprep.subr.mxu0 0.0
    %151 = vmatpush1.msra.mxu0 0.0
    %152 = vmatprep.subr.mxu0 0.0
    %153 = vmatpush1.msra.mxu0 0.0
    %154 = vmatprep.subr.mxu0 0.0
    %155 = vmatpush1.msra.mxu0 0.0
    %156 = vmatprep.subr.mxu0 0.0
    %157 = vmatpush1.msra.mxu0 0.0
    %158 = vmatprep.subr.mxu0 0.0
    %159 = vmatpush1.msra.mxu0 0.0
    %160 = vmatprep.subr.mxu0 0.0
    %161 = vmatpush1.msra.mxu0 0.0
    %162 = vmatprep.subr.mxu0 0.0
    %163 = vmatpush1.msra.mxu0 0.0
    %164 = vmatprep.subr.mxu0 0.0
    %165 = vmatpush1.msra.mxu0 0.0
    %166 = vmatprep.subr.mxu0 0.0
    %167 = vmatpush1.msra.mxu0 0.0
    %168 = vmatprep.subr.mxu0 0.0
    %169 = vmatpush1.msra.mxu0 0.0
    %170 = vmatprep.subr.mxu0 0.0
    %171 = vmatpush1.msra.mxu0 0.0
    %172 = vmatprep.subr.mxu0 0.0
    %173 = vmatpush1.msra.mxu0 0.0
    %174 = vmatprep.subr.mxu0 0.0
    %175 = vmatpush1.msra.mxu0 0.0
    %176 = vmatprep.mubr.f32.mxu0 0.0
    %177 = vmatmul.mubr.f32.gmra.mrb[0].mxu0 %v88
    %v178 = vpop.f32.mrb[0].mxu0
    %v179 = vadd.f32 %v110, %v178
    %v180 = vpop.f32.mrb[0].mxu0
    %181 = vdwg.mxu0
    %v182 = vld [vmem:[#allocation5] sm:$0xff]
    %v183 = vld [vmem:[#allocation5 + $0x8] sm:$0xff]
    %v184 = vld [vmem:[#allocation5 + $0x10] sm:$0xff]
    %v185 = vld [vmem:[#allocation5 + $0x18] sm:$0xff]
    %v186 = vld [vmem:[#allocation5 + $0x20] sm:$0xff]
    %v187 = vld [vmem:[#allocation5 + $0x28] sm:$0xff]
    %v188 = vld [vmem:[#allocation5 + $0x30] sm:$0xff]
    %v189 = vld [vmem:[#allocation5 + $0x38] sm:$0xff]
    %v190 = vld [vmem:[#allocation5 + $0x40] sm:$0xff]
    %v191 = vld [vmem:[#allocation5 + $0x48] sm:$0xff]
    %v192 = vld [vmem:[#allocation5 + $0x50] sm:$0xff]
    %v193 = vld [vmem:[#allocation5 + $0x58] sm:$0xff]
    %v194 = vld [vmem:[#allocation5 + $0x60] sm:$0xff]
    %v195 = vld [vmem:[#allocation5 + $0x68] sm:$0xff]
    %v196 = vld [vmem:[#allocation5 + $0x70] sm:$0xff]
    %v197 = vld [vmem:[#allocation5 + $0x78] sm:$0xff]
    %v198 = vld [vmem:[%s4] sm:$0x1]
    %v200 = vlaneseq
    %v201 = vshrl.u32 %v200, 7
    %v202 = vsub.s32 0, %v201
    %v203 = vrot.slane %v198, %v202
    %205 = vmatprep.subr.mxu0 0.0
    %206 = vmatpush1.msra.mxu0 %v182
    %207 = vmatprep.subr.mxu0 0.0
    %208 = vmatpush1.msra.mxu0 %v183
    %209 = vmatprep.subr.mxu0 0.0
    %210 = vmatpush1.msra.mxu0 %v184
    %211 = vmatprep.subr.mxu0 0.0
    %212 = vmatpush1.msra.mxu0 %v185
    %213 = vmatprep.subr.mxu0 0.0
    %214 = vmatpush1.msra.mxu0 %v186
    %215 = vmatprep.subr.mxu0 0.0
    %216 = vmatpush1.msra.mxu0 %v187
    %217 = vmatprep.subr.mxu0 0.0
    %218 = vmatpush1.msra.mxu0 %v188
    %219 = vmatprep.subr.mxu0 0.0
    %220 = vmatpush1.msra.mxu0 %v189
    %221 = vmatprep.subr.mxu0 0.0
    %222 = vmatpush1.msra.mxu0 %v190
    %223 = vmatprep.subr.mxu0 0.0
    %224 = vmatpush1.msra.mxu0 %v191
    %225 = vmatprep.subr.mxu0 0.0
    %226 = vmatpush1.msra.mxu0 %v192
    %227 = vmatprep.subr.mxu0 0.0
    %228 = vmatpush1.msra.mxu0 %v193
    %229 = vmatprep.subr.mxu0 0.0
    %230 = vmatpush1.msra.mxu0 %v194
    %231 = vmatprep.subr.mxu0 0.0
    %232 = vmatpush1.msra.mxu0 %v195
    %233 = vmatprep.subr.mxu0 0.0
    %234 = vmatpush1.msra.mxu0 %v196
    %235 = vmatprep.subr.mxu0 0.0
    %236 = vmatpush1.msra.mxu0 %v197
    %237 = vmatprep.subr.mxu0 0.0
    %238 = vmatpush1.msra.mxu0 0.0
    %239 = vmatprep.subr.mxu0 0.0
    %240 = vmatpush1.msra.mxu0 0.0
    %241 = vmatprep.subr.mxu0 0.0
    %242 = vmatpush1.msra.mxu0 0.0
    %243 = vmatprep.subr.mxu0 0.0
    %244 = vmatpush1.msra.mxu0 0.0
    %245 = vmatprep.subr.mxu0 0.0
    %246 = vmatpush1.msra.mxu0 0.0
    %247 = vmatprep.subr.mxu0 0.0
    %248 = vmatpush1.msra.mxu0 0.0
    %249 = vmatprep.subr.mxu0 0.0
    %250 = vmatpush1.msra.mxu0 0.0
    %251 = vmatprep.subr.mxu0 0.0
    %252 = vmatpush1.msra.mxu0 0.0
    %253 = vmatprep.subr.mxu0 0.0
    %254 = vmatpush1.msra.mxu0 0.0
    %255 = vmatprep.subr.mxu0 0.0
    %256 = vmatpush1.msra.mxu0 0.0
    %257 = vmatprep.subr.mxu0 0.0
    %258 = vmatpush1.msra.mxu0 0.0
    %259 = vmatprep.subr.mxu0 0.0
    %260 = vmatpush1.msra.mxu0 0.0
    %261 = vmatprep.subr.mxu0 0.0
    %262 = vmatpush1.msra.mxu0 0.0
    %263 = vmatprep.subr.mxu0 0.0
    %264 = vmatpush1.msra.mxu0 0.0
    %265 = vmatprep.subr.mxu0 0.0
    %266 = vmatpush1.msra.mxu0 0.0
    %267 = vmatprep.subr.mxu0 0.0
    %268 = vmatpush1.msra.mxu0 0.0
    %269 = vmatprep.mubr.f32.mxu0 0.0
    %270 = vmatmul.mubr.f32.gmra.mrb[0].mxu0 %v179
    %v271 = vpop.f32.mrb[0].mxu0
    %v272 = vadd.f32 %v203, %v271
    %v273 = vpop.f32.mrb[0].mxu0
    %274 = vdwg.mxu0
    %v275 = vmul.f32 %v272, 0.01
    %v276 = vmax.f32 %v272, %v275
    %v277 = vld [vmem:[#allocation7] sm:$0xff]
    %v278 = vld [vmem:[#allocation7 + $0x8] sm:$0xff]
    %v279 = vld [vmem:[#allocation7 + $0x10] sm:$0xff]
    %v280 = vld [vmem:[#allocation7 + $0x18] sm:$0xff]
    %v281 = vld [vmem:[#allocation7 + $0x20] sm:$0xff]
    %v282 = vld [vmem:[#allocation7 + $0x28] sm:$0xff]
    %v283 = vld [vmem:[#allocation7 + $0x30] sm:$0xff]
    %v284 = vld [vmem:[#allocation7 + $0x38] sm:$0xff]
    %v285 = vld [vmem:[#allocation7 + $0x40] sm:$0xff]
    %v286 = vld [vmem:[#allocation7 + $0x48] sm:$0xff]
    %v287 = vld [vmem:[#allocation7 + $0x50] sm:$0xff]
    %v288 = vld [vmem:[#allocation7 + $0x58] sm:$0xff]
    %v289 = vld [vmem:[#allocation7 + $0x60] sm:$0xff]
    %v290 = vld [vmem:[#allocation7 + $0x68] sm:$0xff]
    %v291 = vld [vmem:[#allocation7 + $0x70] sm:$0xff]
    %v292 = vld [vmem:[#allocation7 + $0x78] sm:$0xff]
    %v293 = vld [vmem:[%s6] sm:$0x1]
    %v295 = vlaneseq
    %v296 = vshrl.u32 %v295, 7
    %v297 = vsub.s32 0, %v296
    %v298 = vrot.slane %v293, %v297
    %300 = vmatprep.subr.mxu0 0.0
    %301 = vmatpush1.msra.mxu0 %v277
    %302 = vmatprep.subr.mxu0 0.0
    %303 = vmatpush1.msra.mxu0 %v278
    %304 = vmatprep.subr.mxu0 0.0
    %305 = vmatpush1.msra.mxu0 %v279
    %306 = vmatprep.subr.mxu0 0.0
    %307 = vmatpush1.msra.mxu0 %v280
    %308 = vmatprep.subr.mxu0 0.0
    %309 = vmatpush1.msra.mxu0 %v281
    %310 = vmatprep.subr.mxu0 0.0
    %311 = vmatpush1.msra.mxu0 %v282
    %312 = vmatprep.subr.mxu0 0.0
    %313 = vmatpush1.msra.mxu0 %v283
    %314 = vmatprep.subr.mxu0 0.0
    %315 = vmatpush1.msra.mxu0 %v284
    %316 = vmatprep.subr.mxu0 0.0
    %317 = vmatpush1.msra.mxu0 %v285
    %318 = vmatprep.subr.mxu0 0.0
    %319 = vmatpush1.msra.mxu0 %v286
    %320 = vmatprep.subr.mxu0 0.0
    %321 = vmatpush1.msra.mxu0 %v287
    %322 = vmatprep.subr.mxu0 0.0
    %323 = vmatpush1.msra.mxu0 %v288
    %324 = vmatprep.subr.mxu0 0.0
    %325 = vmatpush1.msra.mxu0 %v289
    %326 = vmatprep.subr.mxu0 0.0
    %327 = vmatpush1.msra.mxu0 %v290
    %328 = vmatprep.subr.mxu0 0.0
    %329 = vmatpush1.msra.mxu0 %v291
    %330 = vmatprep.subr.mxu0 0.0
    %331 = vmatpush1.msra.mxu0 %v292
    %332 = vmatprep.subr.mxu0 0.0
    %333 = vmatpush1.msra.mxu0 0.0
    %334 = vmatprep.subr.mxu0 0.0
    %335 = vmatpush1.msra.mxu0 0.0
    %336 = vmatprep.subr.mxu0 0.0
    %337 = vmatpush1.msra.mxu0 0.0
    %338 = vmatprep.subr.mxu0 0.0
    %339 = vmatpush1.msra.mxu0 0.0
    %340 = vmatprep.subr.mxu0 0.0
    %341 = vmatpush1.msra.mxu0 0.0
    %342 = vmatprep.subr.mxu0 0.0
    %343 = vmatpush1.msra.mxu0 0.0
    %344 = vmatprep.subr.mxu0 0.0
    %345 = vmatpush1.msra.mxu0 0.0
    %346 = vmatprep.subr.mxu0 0.0
    %347 = vmatpush1.msra.mxu0 0.0
    %348 = vmatprep.subr.mxu0 0.0
    %349 = vmatpush1.msra.mxu0 0.0
    %350 = vmatprep.subr.mxu0 0.0
    %351 = vmatpush1.msra.mxu0 0.0
    %352 = vmatprep.subr.mxu0 0.0
    %353 = vmatpush1.msra.mxu0 0.0
    %354 = vmatprep.subr.mxu0 0.0
    %355 = vmatpush1.msra.mxu0 0.0
    %356 = vmatprep.subr.mxu0 0.0
    %357 = vmatpush1.msra.mxu0 0.0
    %358 = vmatprep.subr.mxu0 0.0
    %359 = vmatpush1.msra.mxu0 0.0
    %360 = vmatprep.subr.mxu0 0.0
    %361 = vmatpush1.msra.mxu0 0.0
    %362 = vmatprep.subr.mxu0 0.0
    %363 = vmatpush1.msra.mxu0 0.0
    %364 = vmatprep.mubr.f32.mxu0 0.0
    %365 = vmatmul.mubr.f32.gmra.mrb[0].mxu0 %v276
    %v366 = vpop.f32.mrb[0].mxu0
    %v367 = vadd.f32 %v298, %v366
    %v368 = vpop.f32.mrb[0].mxu0
    %369 = vdwg.mxu0
    %v370 = vmul.f32 %v367, 0.01
    %v371 = vmax.f32 %v367, %v370
    %v372 = vld [vmem:[#allocation8] sm:$0xff]
    %v373 = vld [vmem:[#allocation8 + $0x8] sm:$0xff]
    %v374 = vld [vmem:[#allocation8 + $0x10] sm:$0xff]
    %v375 = vld [vmem:[#allocation8 + $0x18] sm:$0xff]
    %v376 = vld [vmem:[#allocation8 + $0x20] sm:$0xff]
    %v377 = vld [vmem:[#allocation8 + $0x28] sm:$0xff]
    %v378 = vld [vmem:[#allocation8 + $0x30] sm:$0xff]
    %v379 = vld [vmem:[#allocation8 + $0x38] sm:$0xff]
    %v380 = vld [vmem:[#allocation8 + $0x40] sm:$0xff]
    %v381 = vld [vmem:[#allocation8 + $0x48] sm:$0xff]
    %v382 = vld [vmem:[#allocation8 + $0x50] sm:$0xff]
    %v383 = vld [vmem:[#allocation8 + $0x58] sm:$0xff]
    %v384 = vld [vmem:[#allocation8 + $0x60] sm:$0xff]
    %v385 = vld [vmem:[#allocation8 + $0x68] sm:$0xff]
    %v386 = vld [vmem:[#allocation8 + $0x70] sm:$0xff]
    %v387 = vld [vmem:[#allocation8 + $0x78] sm:$0xff]
    %v388 = vld [vmem:[#allocation8 + $0x80] sm:$0xff]
    %v389 = vld [vmem:[#allocation8 + $0x88] sm:$0xff]
    %v390 = vld [vmem:[#allocation8 + $0x90] sm:$0xff]
    %v391 = vld [vmem:[#allocation8 + $0x98] sm:$0xff]
    %v392 = vld [vmem:[#allocation8 + $0xa0] sm:$0xff]
    %v393 = vld [vmem:[#allocation8 + $0xa8] sm:$0xff]
    %v394 = vld [vmem:[#allocation8 + $0xb0] sm:$0xff]
    %v395 = vld [vmem:[#allocation8 + $0xb8] sm:$0xff]
    %v396 = vld [vmem:[#allocation8 + $0xc0] sm:$0xff]
    %v397 = vld [vmem:[#allocation8 + $0xc8] sm:$0xff]
    %v398 = vld [vmem:[#allocation8 + $0xd0] sm:$0xff]
    %v399 = vld [vmem:[#allocation8 + $0xd8] sm:$0xff]
    %v400 = vld [vmem:[#allocation8 + $0xe0] sm:$0xff]
    %v401 = vld [vmem:[#allocation8 + $0xe8] sm:$0xff]
    %v402 = vld [vmem:[#allocation8 + $0xf0] sm:$0xff]
    %v403 = vld [vmem:[#allocation8 + $0xf8] sm:$0xff]
    %v404 = vld [vmem:[%s8] sm:$0x3]
    %v406 = vlaneseq
    %v407 = vshrl.u32 %v406, 7
    %v408 = vsub.s32 0, %v407
    %v409 = vrot.slane %v404, %v408
    %v410 = vlaneseq
    %v411 = vshrl.u32 %v410, 7
    %v412 = vsub.s32 1, %v411
    %v413 = vrot.slane %v404, %v412
    %416 = vmatprep.subr.mxu0 %v373
    %417 = vmatpush1.msra.mxu0 %v372
    %418 = vmatprep.subr.mxu0 %v375
    %419 = vmatpush1.msra.mxu0 %v374
    %420 = vmatprep.subr.mxu0 %v377
    %421 = vmatpush1.msra.mxu0 %v376
    %422 = vmatprep.subr.mxu0 %v379
    %423 = vmatpush1.msra.mxu0 %v378
    %424 = vmatprep.subr.mxu0 %v381
    %425 = vmatpush1.msra.mxu0 %v380
    %426 = vmatprep.subr.mxu0 %v383
    %427 = vmatpush1.msra.mxu0 %v382
    %428 = vmatprep.subr.mxu0 %v385
    %429 = vmatpush1.msra.mxu0 %v384
    %430 = vmatprep.subr.mxu0 %v387
    %431 = vmatpush1.msra.mxu0 %v386
    %432 = vmatprep.subr.mxu0 %v389
    %433 = vmatpush1.msra.mxu0 %v388
    %434 = vmatprep.subr.mxu0 %v391
    %435 = vmatpush1.msra.mxu0 %v390
    %436 = vmatprep.subr.mxu0 %v393
    %437 = vmatpush1.msra.mxu0 %v392
    %438 = vmatprep.subr.mxu0 %v395
    %439 = vmatpush1.msra.mxu0 %v394
    %440 = vmatprep.subr.mxu0 %v397
    %441 = vmatpush1.msra.mxu0 %v396
    %442 = vmatprep.subr.mxu0 %v399
    %443 = vmatpush1.msra.mxu0 %v398
    %444 = vmatprep.subr.mxu0 %v401
    %445 = vmatpush1.msra.mxu0 %v400
    %446 = vmatprep.subr.mxu0 %v403
    %447 = vmatpush1.msra.mxu0 %v402
    %448 = vmatprep.subr.mxu0 0.0
    %449 = vmatpush1.msra.mxu0 0.0
    %450 = vmatprep.subr.mxu0 0.0
    %451 = vmatpush1.msra.mxu0 0.0
    %452 = vmatprep.subr.mxu0 0.0
    %453 = vmatpush1.msra.mxu0 0.0
    %454 = vmatprep.subr.mxu0 0.0
    %455 = vmatpush1.msra.mxu0 0.0
    %456 = vmatprep.subr.mxu0 0.0
    %457 = vmatpush1.msra.mxu0 0.0
    %458 = vmatprep.subr.mxu0 0.0
    %459 = vmatpush1.msra.mxu0 0.0
    %460 = vmatprep.subr.mxu0 0.0
    %461 = vmatpush1.msra.mxu0 0.0
    %462 = vmatprep.subr.mxu0 0.0
    %463 = vmatpush1.msra.mxu0 0.0
    %464 = vmatprep.subr.mxu0 0.0
    %465 = vmatpush1.msra.mxu0 0.0
    %466 = vmatprep.subr.mxu0 0.0
    %467 = vmatpush1.msra.mxu0 0.0
    %468 = vmatprep.subr.mxu0 0.0
    %469 = vmatpush1.msra.mxu0 0.0
    %470 = vmatprep.subr.mxu0 0.0
    %471 = vmatpush1.msra.mxu0 0.0
    %472 = vmatprep.subr.mxu0 0.0
    %473 = vmatpush1.msra.mxu0 0.0
    %474 = vmatprep.subr.mxu0 0.0
    %475 = vmatpush1.msra.mxu0 0.0
    %476 = vmatprep.subr.mxu0 0.0
    %477 = vmatpush1.msra.mxu0 0.0
    %478 = vmatprep.subr.mxu0 0.0
    %479 = vmatpush1.msra.mxu0 0.0
    %480 = vmatprep.mubr.f32.mxu0 0.0
    %481 = vmatmul.mubr.f32.gmra.mrb[0].mxu0 %v371
    %v482 = vpop.f32.mrb[0].mxu0
    %v483 = vadd.f32 %v409, %v482
    %v484 = vpop.f32.mrb[0].mxu0
    %v485 = vadd.f32 %v413, %v484
    %486 = vdwg.mxu0
    %v487 = vxor.u32 %v483, 2147483648
    %v488 = vxor.u32 %v485, 2147483648
    %v489 = vmul.f32 %v487, 1.442695
    %v490 = vpow.pop %v489
    %v491 = vmul.f32 %v488, 1.442695
    %v492 = vpow.pop %v491
    %v493 = vadd.f32 %v490, 1.0
    %v494 = vadd.f32 %v492, 1.0
    %v495 = vrcp.pop %v493
    %v496 = vmul.f32 1.0, %v495
    %v497 = vrcp.pop %v494
    %v498 = vmul.f32 1.0, %v497
    %499 = vst [vmem:[#allocation10] sm:$0xff] %v496
    %500 = vst [vmem:[#allocation10 + $0x8] sm:$0xff] %v498
    // Predicated region
    $region54: #{_lambda_.1} parent=1 // pred_check
      _
    $region55: #{_lambda_.1} parent=1 // pred_check_branch
      %502 = sbr.rel (0) target = $region57
    $region56: #{_lambda_.1} parent=1 // pred_region
      %s504 = ssub.s32 256, 256
      %505 = vsyncadd [#allocation4], %s504
      %s507 = sshll.u32 [#allocation10], 4
      %s508 = int_to_ptr.vmem [resolvable:$true] %s507
      %510 = dma.vmem_to_hbm [thread:$0]  %s508, 256, %s9, [#allocation4]
    $region57: #{_lambda_.1} parent=1 // pred_fallthru
      _
    // Predicated region
    $region58: #{_lambda_.1} parent=1 // pred_check
      _
    $region59: #{_lambda_.1} parent=1 // pred_check_branch
      %512 = sbr.rel (0) target = $region61
    $region60: #{_lambda_.1} parent=1 // pred_region
      %513 = dma.done [#allocation4], 256
    $region61: #{_lambda_.1} parent=1 // pred_fallthru
      _
    %514 = vsyncpa [#allocation3], 1
    %515 = vsyncpa [#allocation6], 1
    %516 = vsyncpa [#allocation9], 1
    %517 = vsyncpa [#allocation4], 1

</llo_original>
